<compile_context>
chip_gen: v7x
topology: tpu7x:2x2x1
jax: 0.10.0
libtpu: 0.0.40
codegen_flags: <defaults>
</compile_context>

<pallas_src>
import functools

import jax
import jax.numpy as jnp
from jax import lax
from jax.experimental import pallas as pl
from jax.experimental.pallas import tpu as pltpu


# ---------------------------------------------------------------------------
# Kernel 1: Untied2DPositionalEncoder
# ---------------------------------------------------------------------------
def _untied_pos_kernel(eps, use_bf16,
                       hpos_ref,    # (tile_h, 1, dim)
                       wpos_ref,    # (1, w, dim)        VMEM-resident
                       gamma_ref,   # (1, dim)           VMEM-resident
                       beta_ref,    # (1, dim)           VMEM-resident
                       wT_ref,      # (dim, 2*dim)       fused [Wq*scale ; Wk]^T (bf16 or f32)
                       bias_ref,    # (1, 2*dim)         fused [bq*scale , bk]   (f32)
                       out_ref):    # (tile_h*w, 2*dim)
    # pos[i, j, :] = h_pos[i] + w_pos[j]  — broadcast add done in-kernel.
    pos = hpos_ref[...] + wpos_ref[...]                       # (tile_h, w, dim)
    tile_h, w, dim = pos.shape
    pos = pos.reshape(tile_h * w, dim)                        # free relayout when w % 8 == 0

    # LayerNorm over the feature dim (f32, affine).
    mean = jnp.mean(pos, axis=-1, keepdims=True)
    centered = pos - mean
    var = jnp.mean(centered * centered, axis=-1, keepdims=True)
    xn = centered * lax.rsqrt(var + eps)
    xn = xn * gamma_ref[...] + beta_ref[...]                  # (tile_h*w, dim)

    if use_bf16:
        xn = xn.astype(jnp.bfloat16)                          # weight already bf16 (wrapper)

    # ONE flattened MXU matmul (M = tile_h*w) with f32 accumulation, one store.
    qk = jnp.dot(xn, wT_ref[...], preferred_element_type=jnp.float32)  # (tile_h*w, 2*dim)
    out_ref[...] = qk + bias_ref[...]


def _pick_tile_h(h, w, target_rows=512):
    """Largest divisor t of h with t*w <= target_rows and h//t >= 2 (megacore),
    preferring tiles whose row count is a multiple of 128 (MXU fill)."""
    cands = []
    for t in range(1, h + 1):
        if h % t:
            continue
        if t * w > target_rows:
            continue
        if h > 1 and h // t < 2:
            continue
        cands.append(t)
    if not cands:
        return 1
    aligned = [t for t in cands if (t * w) % 128 == 0]
    return max(aligned) if aligned else max(cands)


def untied_2d_positional_encoder(w_pos, h_pos, ln_gamma, ln_beta,
                                 wq, bq, wk, bk, num_heads, scale=None,
                                 eps=1e-5, tile_h=None, use_bf16_matmul=True):
    """JAX/Pallas equivalent of Untied2DPositionalEncoder.forward().

    w_pos: (w, dim)   h_pos: (h, dim)
    wq, wk: PyTorch-convention Linear weights of shape (dim, dim) = (out, in).
    Returns (q, k), each (h*w, dim) f32, with `scale` already folded into q
    (equivalent to the per-head-scaled q of the reference module).
    """
    w, dim = w_pos.shape
    h, _ = h_pos.shape
    seq = h * w
    head_dim = dim // num_heads
    if scale is None:
        scale = float(head_dim) ** (-0.5)
    if tile_h is None:
        tile_h = _pick_tile_h(h, w)
    if h % tile_h != 0:
        raise ValueError(f"tile_h={tile_h} must divide h={h}")
    tile_rows = tile_h * w

    # Fused projection, pre-transposed to (in, 2*out) so the kernel does a plain
    # A@B contraction (no trans-B / per-step XLU transpose); q half pre-scaled.
    w_fused_t = jnp.concatenate([wq * scale, wk], axis=0).T        # (dim, 2*dim)
    if use_bf16_matmul:
        w_fused_t = w_fused_t.astype(jnp.bfloat16)                 # half the resident bytes
    b_fused = jnp.concatenate([bq * scale, bk], axis=0).reshape(1, 2 * dim).astype(jnp.float32)

    h_pos3 = h_pos.reshape(h, 1, dim)
    w_pos3 = w_pos.reshape(1, w, dim)
    gamma2 = ln_gamma.reshape(1, dim)
    beta2 = ln_beta.reshape(1, dim)

    out = pl.pallas_call(
        functools.partial(_untied_pos_kernel, eps, use_bf16_matmul),
        out_shape=jax.ShapeDtypeStruct((seq, 2 * dim), jnp.float32),
        grid=(h // tile_h,),
        in_specs=[
            pl.BlockSpec((tile_h, 1, dim), lambda i: (i, 0, 0)),   # h rows: tiled
            pl.BlockSpec((1, w, dim), lambda i: (0, 0, 0)),        # resident
            pl.BlockSpec((1, dim), lambda i: (0, 0)),              # resident
            pl.BlockSpec((1, dim), lambda i: (0, 0)),              # resident
            pl.BlockSpec((dim, 2 * dim), lambda i: (0, 0)),        # resident
            pl.BlockSpec((1, 2 * dim), lambda i: (0, 0)),          # resident
        ],
        out_specs=pl.BlockSpec((tile_rows, 2 * dim), lambda i: (i, 0)),
        compiler_params=pltpu.CompilerParams(
            dimension_semantics=("parallel",),
            vmem_limit_bytes=32 * 1024 * 1024),
    )(h_pos3, w_pos3, gamma2, beta2, w_fused_t, b_fused)

    # Layout plumbing only: split the fused (seq, 2*dim) slab into q and k.
    return out[:, :dim], out[:, dim:]


# ---------------------------------------------------------------------------
# Kernel 2: all four (q_pos @ k_pos^T + rel-pos bias) maps in one call
# ---------------------------------------------------------------------------
def _attn_pos_kernel(zq_ref, zk_ref, xq_ref, xk_ref,          # (hd, Lz)/(hd, Lx) per-head tiles
                     zb_ref, xb_ref, zxb_ref, xzb_ref,        # (1, Lq, Lk) per-head biases
                     zo_ref, xo_ref, zxo_ref, xzo_ref):       # (1, Lq, Lk) outputs
    dn = (((0,), (0,)), ((), ()))   # contract the head_dim (leading) axis of both
    zq = zq_ref[...]
    zk = zk_ref[...]
    xq = xq_ref[...]
    xk = xk_ref[...]
    zo_ref[0] = lax.dot_general(zq, zk, dn, preferred_element_type=jnp.float32) + zb_ref[0]
    xo_ref[0] = lax.dot_general(xq, xk, dn, preferred_element_type=jnp.float32) + xb_ref[0]
    zxo_ref[0] = lax.dot_general(zq, xk, dn, preferred_element_type=jnp.float32) + zxb_ref[0]
    xzo_ref[0] = lax.dot_general(xq, zk, dn, preferred_element_type=jnp.float32) + xzb_ref[0]


def attn_pos_bias_all(z_q, z_k, x_q, x_k, z_bias, x_bias, zx_bias, xz_bias, num_heads):
    """All four bias maps of FeatureFusionEncoder.forward in one pallas_call.

    z_q/z_k: (Lz, dim)   x_q/x_k: (Lx, dim)   *_bias: (nh, Lq, Lk)
    Returns four arrays of shape (1, nh, Lq, Lk).
    """
    lz, dim = z_q.shape
    lx, _ = x_q.shape
    hd = dim // num_heads

    # Tiny XLA transposes -> lane-dense (dim, L) slabs whose per-head
    # (hd, L) tiles are sublane-aligned BlockSpec slices.
    zq_t, zk_t = z_q.T, z_k.T
    xq_t, xk_t = x_q.T, x_k.T

    z_self, x_self, zx_cross, xz_cross = pl.pallas_call(
        _attn_pos_kernel,
        out_shape=(jax.ShapeDtypeStruct((num_heads, lz, lz), jnp.float32),
                   jax.ShapeDtypeStruct((num_heads, lx, lx), jnp.float32),
                   jax.ShapeDtypeStruct((num_heads, lz, lx), jnp.float32),
                   jax.ShapeDtypeStruct((num_heads, lx, lz), jnp.float32)),
        grid=(num_heads,),
        in_specs=[
            pl.BlockSpec((hd, lz), lambda n: (n, 0)),
            pl.BlockSpec((hd, lz), lambda n: (n, 0)),
            pl.BlockSpec((hd, lx), lambda n: (n, 0)),
            pl.BlockSpec((hd, lx), lambda n: (n, 0)),
            pl.BlockSpec((1, lz, lz), lambda n: (n, 0, 0)),
            pl.BlockSpec((1, lx, lx), lambda n: (n, 0, 0)),
            pl.BlockSpec((1, lz, lx), lambda n: (n, 0, 0)),
            pl.BlockSpec((1, lx, lz), lambda n: (n, 0, 0)),
        ],
        out_specs=(
            pl.BlockSpec((1, lz, lz), lambda n: (n, 0, 0)),
            pl.BlockSpec((1, lx, lx), lambda n: (n, 0, 0)),
            pl.BlockSpec((1, lz, lx), lambda n: (n, 0, 0)),
            pl.BlockSpec((1, lx, lz), lambda n: (n, 0, 0)),
        ),
        compiler_params=pltpu.CompilerParams(
            dimension_semantics=("parallel",),
            vmem_limit_bytes=32 * 1024 * 1024),
    )(zq_t, zk_t, xq_t, xk_t, z_bias, x_bias, zx_bias, xz_bias)

    return z_self[None], x_self[None], zx_cross[None], xz_cross[None]


# ---------------------------------------------------------------------------
# FeatureFusionEncoder.forward
# ---------------------------------------------------------------------------
def feature_fusion_encoder_forward(z, x, z_enc_params, x_enc_params,
                                   z_rel_pos_index, x_rel_pos_index,
                                   z_x_rel_pos_index, x_z_rel_pos_index,
                                   z_rel_pos_bias_table, x_rel_pos_bias_table,
                                   z_x_rel_pos_bias_table, x_z_rel_pos_bias_table,
                                   z_pos=None, x_pos=None,
                                   use_bf16_matmul=True,
                                   z_tile_h=None, x_tile_h=None):
    assert z_pos is None and x_pos is None
    num_heads = z_enc_params["num_heads"]

    z_q, z_k = untied_2d_positional_encoder(**z_enc_params, tile_h=z_tile_h,
                                            use_bf16_matmul=use_bf16_matmul)
    x_q, x_k = untied_2d_positional_encoder(**x_enc_params, tile_h=x_tile_h,
                                            use_bf16_matmul=use_bf16_matmul)

    # Data-dependent relative-position embedding gather (RelativePosition2DEncoder)
    # stays in XLA glue (per-element gather; see header comment).
    z_bias = z_rel_pos_bias_table[:, z_rel_pos_index]
    x_bias = x_rel_pos_bias_table[:, x_rel_pos_index]
    zx_bias = z_x_rel_pos_bias_table[:, z_x_rel_pos_index]
    xz_bias = x_z_rel_pos_bias_table[:, x_z_rel_pos_index]

    z_self, x_self, zx_cross, xz_cross = attn_pos_bias_all(
        z_q, z_k, x_q, x_k, z_bias, x_bias, zx_bias, xz_bias, num_heads)

    # TODO(synk): feature_fusion_layers are constructor-injected (FeatureFusionLayer)
    # and not defined in this spec; tokens pass through unchanged.
    return z, x, (z_self, x_self, zx_cross, xz_cross)


# ---------------------------------------------------------------------------
# Pure-JAX references
# ---------------------------------------------------------------------------
def _ref_untied_pos(w_pos, h_pos, ln_gamma, ln_beta, wq, bq, wk, bk,
                    num_heads, scale=None, eps=1e-5):
    w, dim = w_pos.shape
    h, _ = h_pos.shape
    head_dim = dim // num_heads
    if scale is None:
        scale = float(head_dim) ** (-0.5)
    pos = (w_pos[None, :, :] + h_pos[:, None, :]).reshape(h * w, dim)
    mean = pos.mean(-1, keepdims=True)
    var = ((pos - mean) ** 2).mean(-1, keepdims=True)
    pos = (pos - mean) / jnp.sqrt(var + eps) * ln_gamma + ln_beta
    q = pos @ wq.T + bq
    k = pos @ wk.T + bk
    seq = h * w
    q = q.reshape(seq, num_heads, head_dim).transpose(1, 0, 2) * scale
    k = k.reshape(seq, num_heads, head_dim).transpose(1, 0, 2)
    return q, k


def _ref_attn_pos(q, k, table, idx):
    s = jnp.einsum('nqd,nkd->nqk', q, k, precision=jax.lax.Precision.HIGHEST)
    return (s + table[:, idx])[None]


def _split_heads(v, num_heads):
    s, d = v.shape
    return v.reshape(s, num_heads, d // num_heads).transpose(1, 0, 2)


# ---------------------------------------------------------------------------
# Demo
# ---------------------------------------------------------------------------
if __name__ == "__main__":
    dim, num_heads = 32, 4
    Hz = Wz = 8          # template feature map 8x8   -> L_z = 64
    Hx = Wx = 16         # search   feature map 16x16 -> L_x = 256
    Lz, Lx = Hz * Wz, Hx * Wx
    B = 2
    num_rel = 64

    key = jax.random.PRNGKey(0)
    keys = list(jax.random.split(key, 24))
    kit = iter(keys)

    def trunc(k, shape):
        return 0.02 * jax.random.truncated_normal(k, -2.0, 2.0, shape, jnp.float32)

    def make_enc_params(h, w):
        bound = 1.0 / (dim ** 0.5)
        return dict(
            w_pos=trunc(next(kit), (w, dim)),
            h_pos=trunc(next(kit), (h, dim)),
            ln_gamma=jnp.ones((dim,), jnp.float32),
            ln_beta=jnp.zeros((dim,), jnp.float32),
            wq=jax.random.uniform(next(kit), (dim, dim), jnp.float32, -bound, bound),
            bq=jax.random.uniform(next(kit), (dim,), jnp.float32, -bound, bound),
            wk=jax.random.uniform(next(kit), (dim, dim), jnp.float32, -bound, bound),
            bk=jax.random.uniform(next(kit), (dim,), jnp.float32, -bound, bound),
            num_heads=num_heads,
        )

    z_enc = make_enc_params(Hz, Wz)
    x_enc = make_enc_params(Hx, Wx)

    z = jax.random.normal(next(kit), (B, Lz, dim), jnp.float32)
    x = jax.random.normal(next(kit), (B, Lx, dim), jnp.float32)

    z_idx = jax.random.randint(next(kit), (Lz, Lz), 0, num_rel)
    x_idx = jax.random.randint(next(kit), (Lx, Lx), 0, num_rel)
    zx_idx = jax.random.randint(next(kit), (Lz, Lx), 0, num_rel)
    xz_idx = jax.random.randint(next(kit), (Lx, Lz), 0, num_rel)

    z_tbl = trunc(next(kit), (num_heads, num_rel))
    x_tbl = trunc(next(kit), (num_heads, num_rel))
    zx_tbl = trunc(next(kit), (num_heads, num_rel))
    xz_tbl = trunc(next(kit), (num_heads, num_rel))

    # Full forward (bf16-at-the-MXU fast path, f32 accumulation).
    z_out, x_out, (z_self, x_self, zx_cross, xz_cross) = feature_fusion_encoder_forward(
        z, x, z_enc, x_enc,
        z_idx, x_idx, zx_idx, xz_idx,
        z_tbl, x_tbl, zx_tbl, xz_tbl,
        use_bf16_matmul=True)
    jax.block_until_ready((z_out, x_out, z_self, x_self, zx_cross, xz_cross))

    # References.
    ref_zq, ref_zk = _ref_untied_pos(**z_enc)
    ref_xq, ref_xk = _ref_untied_pos(**x_enc)
    ref_z_self = _ref_attn_pos(ref_zq, ref_zk, z_tbl, z_idx)
    ref_x_self = _ref_attn_pos(ref_xq, ref_xk, x_tbl, x_idx)
    ref_zx = _ref_attn_pos(ref_zq, ref_xk, zx_tbl, zx_idx)
    ref_xz = _ref_attn_pos(ref_xq, ref_zk, xz_tbl, xz_idx)

    # Shape checks.
    assert z_self.shape == (1, num_heads, Lz, Lz)
    assert x_self.shape == (1, num_heads, Lx, Lx)
    assert zx_cross.shape == (1, num_heads, Lz, Lx)
    assert xz_cross.shape == (1, num_heads, Lx, Lz)
    assert z_out is z and x_out is x   # layers are pass-through (TODO above)

    # Numeric checks: bf16 fast path (loose tolerance by design).
    assert jnp.allclose(z_self, ref_z_self, atol=1e-1, rtol=1e-1)
    assert jnp.allclose(x_self, ref_x_self, atol=1e-1, rtol=1e-1)
    assert jnp.allclose(zx_cross, ref_zx, atol=1e-1, rtol=1e-1)
    assert jnp.allclose(xz_cross, ref_xz, atol=1e-1, rtol=1e-1)

    # Numeric checks: positional-encoder kernel, f32 path.
    zq32, zk32 = untied_2d_positional_encoder(**z_enc, use_bf16_matmul=False)
    xq32, xk32 = untied_2d_positional_encoder(**x_enc, use_bf16_matmul=False)
    jax.block_until_ready((zq32, zk32, xq32, xk32))
    assert jnp.allclose(_split_heads(zq32, num_heads), ref_zq, atol=1e-4, rtol=1e-4)
    assert jnp.allclose(_split_heads(zk32, num_heads), ref_zk, atol=1e-4, rtol=1e-4)
    assert jnp.allclose(_split_heads(xq32, num_heads), ref_xq, atol=1e-4, rtol=1e-4)
    assert jnp.allclose(_split_heads(xk32, num_heads), ref_xk, atol=1e-4, rtol=1e-4)

    # Numeric checks: fused attention-bias kernel on the f32-path q/k.
    z_self32, x_self32, zx32, xz32 = attn_pos_bias_all(
        zq32, zk32, xq32, xk32,
        z_tbl[:, z_idx], x_tbl[:, x_idx], zx_tbl[:, zx_idx], xz_tbl[:, xz_idx],
        num_heads)
    jax.block_until_ready((z_self32, x_self32, zx32, xz32))
    assert jnp.allclose(z_self32, ref_z_self, atol=1e-4, rtol=1e-4)
    assert jnp.allclose(x_self32, ref_x_self, atol=1e-4, rtol=1e-4)
    assert jnp.allclose(zx32, ref_zx, atol=1e-4, rtol=1e-4)
    assert jnp.allclose(xz32, ref_xz, atol=1e-4, rtol=1e-4)

    print("KERNEL_OK")
</pallas_src>

<mosaic_0001>
module attributes {stable_mosaic.version = 11 : i64} {
  func.func @_untied_pos_kernel(%arg0: i32, %arg1: memref<4x1x32xf32, #tpu.memory_space<vmem>>, %arg2: memref<1x8x32xf32, #tpu.memory_space<vmem>>, %arg3: memref<1x32xf32, #tpu.memory_space<vmem>>, %arg4: memref<1x32xf32, #tpu.memory_space<vmem>>, %arg5: memref<32x64xbf16, #tpu.memory_space<vmem>>, %arg6: memref<1x64xf32, #tpu.memory_space<vmem>>, %arg7: memref<32x64xf32, #tpu.memory_space<vmem>>) attributes {dimension_semantics = [#tpu.dimension_semantics<parallel>], iteration_bounds = array<i64: 2>, scalar_prefetch = 0 : i64, scratch_operands = 0 : i64, tpu.core_type = #tpu.core_type<tc>, window_params = [{transform_indices = @transform_0, window_bounds = array<i64: 4, 1, 32>}, {pipeline_mode = #tpu.pipeline_mode<synchronous>, transform_indices = @transform_1, window_bounds = array<i64: 1, 8, 32>}, {pipeline_mode = #tpu.pipeline_mode<synchronous>, transform_indices = @transform_2, window_bounds = array<i64: 1, 32>}, {pipeline_mode = #tpu.pipeline_mode<synchronous>, transform_indices = @transform_3, window_bounds = array<i64: 1, 32>}, {pipeline_mode = #tpu.pipeline_mode<synchronous>, transform_indices = @transform_4, window_bounds = array<i64: 32, 64>}, {pipeline_mode = #tpu.pipeline_mode<synchronous>, transform_indices = @transform_5, window_bounds = array<i64: 1, 64>}, {transform_indices = @transform_6, window_bounds = array<i64: 32, 64>}]} {
    %c0 = arith.constant 0 : index
    %c0_0 = arith.constant 0 : index
    %c0_1 = arith.constant 0 : index
    %0 = vector.load %arg1[%c0, %c0_0, %c0_1] : memref<4x1x32xf32, #tpu.memory_space<vmem>>, vector<4x1x32xf32>
    %c0_2 = arith.constant 0 : index
    %c0_3 = arith.constant 0 : index
    %c0_4 = arith.constant 0 : index
    %1 = vector.load %arg2[%c0_2, %c0_3, %c0_4] : memref<1x8x32xf32, #tpu.memory_space<vmem>>, vector<1x8x32xf32>
    %2 = vector.broadcast %0 : vector<4x1x32xf32> to vector<4x8x32xf32>
    %3 = vector.broadcast %1 : vector<1x8x32xf32> to vector<4x8x32xf32>
    %4 = arith.addf %2, %3 : vector<4x8x32xf32>
    %5 = vector.shape_cast %4 : vector<4x8x32xf32> to vector<32x32xf32>
    %cst = arith.constant dense<0.000000e+00> : vector<32xf32>
    %6 = vector.multi_reduction <add>, %5, %cst [1] : vector<32x32xf32> to vector<32xf32>
    %7 = vector.shape_cast %6 : vector<32xf32> to vector<32x1xf32>
    %cst_5 = arith.constant 3.200000e+01 : f32
    %8 = vector.broadcast %cst_5 : f32 to vector<32x1xf32>
    %9 = arith.divf %7, %8 : vector<32x1xf32>
    %10 = vector.broadcast %9 : vector<32x1xf32> to vector<32x32xf32>
    %11 = arith.subf %5, %10 : vector<32x32xf32>
    %12 = arith.mulf %11, %11 : vector<32x32xf32>
    %cst_6 = arith.constant dense<0.000000e+00> : vector<32xf32>
    %13 = vector.multi_reduction <add>, %12, %cst_6 [1] : vector<32x32xf32> to vector<32xf32>
    %14 = vector.shape_cast %13 : vector<32xf32> to vector<32x1xf32>
    %cst_7 = arith.constant 3.200000e+01 : f32
    %15 = vector.broadcast %cst_7 : f32 to vector<32x1xf32>
    %16 = arith.divf %14, %15 : vector<32x1xf32>
    %cst_8 = arith.constant 9.99999974E-6 : f32
    %17 = vector.broadcast %cst_8 : f32 to vector<32x1xf32>
    %18 = arith.addf %16, %17 : vector<32x1xf32>
    %19 = math.rsqrt %18 : vector<32x1xf32>
    %20 = vector.broadcast %19 : vector<32x1xf32> to vector<32x32xf32>
    %21 = arith.mulf %11, %20 : vector<32x32xf32>
    %c0_9 = arith.constant 0 : index
    %c0_10 = arith.constant 0 : index
    %22 = vector.load %arg3[%c0_9, %c0_10] : memref<1x32xf32, #tpu.memory_space<vmem>>, vector<1x32xf32>
    %23 = vector.broadcast %22 : vector<1x32xf32> to vector<32x32xf32>
    %24 = arith.mulf %21, %23 : vector<32x32xf32>
    %c0_11 = arith.constant 0 : index
    %c0_12 = arith.constant 0 : index
    %25 = vector.load %arg4[%c0_11, %c0_12] : memref<1x32xf32, #tpu.memory_space<vmem>>, vector<1x32xf32>
    %26 = vector.broadcast %25 : vector<1x32xf32> to vector<32x32xf32>
    %27 = arith.addf %24, %26 : vector<32x32xf32>
    %28 = arith.truncf %27 : vector<32x32xf32> to vector<32x32xbf16>
    %c0_13 = arith.constant 0 : index
    %c0_14 = arith.constant 0 : index
    %29 = vector.load %arg5[%c0_13, %c0_14] : memref<32x64xbf16, #tpu.memory_space<vmem>>, vector<32x64xbf16>
    %cst_15 = arith.constant dense<0.000000e+00> : vector<32x64xf32>
    %30 = tpu.matmul %28, %29, %cst_15 {dimension_numbers = #tpu.dot_dimension_numbers<[1], [0], [0], [1], [0, 0, 1, 1], [], []>} : vector<32x32xbf16>, vector<32x64xbf16>, vector<32x64xf32> -> vector<32x64xf32>
    %c0_16 = arith.constant 0 : index
    %c0_17 = arith.constant 0 : index
    %31 = vector.load %arg6[%c0_16, %c0_17] : memref<1x64xf32, #tpu.memory_space<vmem>>, vector<1x64xf32>
    %32 = vector.broadcast %31 : vector<1x64xf32> to vector<32x64xf32>
    %33 = arith.addf %30, %32 : vector<32x64xf32>
    %c0_18 = arith.constant 0 : index
    %c0_19 = arith.constant 0 : index
    %34 = vector.load %arg7[%c0_18, %c0_19] : memref<32x64xf32, #tpu.memory_space<vmem>>, vector<32x64xf32>
    tpu.vector_store %arg7[%c0_18, %c0_19], %33 {strides = array<i32>} : memref<32x64xf32, #tpu.memory_space<vmem>>, vector<32x64xf32>,
    return
  }
  func.func @transform_0(%arg0: i32) -> (i32, i32, i32) {
    %c0_i32 = arith.constant 0 : i32
    %c0_i32_0 = arith.constant 0 : i32
    %c0_i32_1 = arith.constant 0 : i32
    return %arg0, %c0_i32, %c0_i32_0 : i32, i32, i32
  }
  func.func @transform_1(%arg0: i32) -> (i32, i32, i32) {
    %c0_i32 = arith.constant 0 : i32
    %c0_i32_0 = arith.constant 0 : i32
    %c0_i32_1 = arith.constant 0 : i32
    %c0_i32_2 = arith.constant 0 : i32
    return %c0_i32, %c0_i32_0, %c0_i32_1 : i32, i32, i32
  }
  func.func @transform_2(%arg0: i32) -> (i32, i32) {
    %c0_i32 = arith.constant 0 : i32
    %c0_i32_0 = arith.constant 0 : i32
    %c0_i32_1 = arith.constant 0 : i32
    return %c0_i32, %c0_i32_0 : i32, i32
  }
  func.func @transform_3(%arg0: i32) -> (i32, i32) {
    %c0_i32 = arith.constant 0 : i32
    %c0_i32_0 = arith.constant 0 : i32
    %c0_i32_1 = arith.constant 0 : i32
    return %c0_i32, %c0_i32_0 : i32, i32
  }
  func.func @transform_4(%arg0: i32) -> (i32, i32) {
    %c0_i32 = arith.constant 0 : i32
    %c0_i32_0 = arith.constant 0 : i32
    %c0_i32_1 = arith.constant 0 : i32
    return %c0_i32, %c0_i32_0 : i32, i32
  }
  func.func @transform_5(%arg0: i32) -> (i32, i32) {
    %c0_i32 = arith.constant 0 : i32
    %c0_i32_0 = arith.constant 0 : i32
    %c0_i32_1 = arith.constant 0 : i32
    return %c0_i32, %c0_i32_0 : i32, i32
  }
  func.func @transform_6(%arg0: i32) -> (i32, i32) {
    %c0_i32 = arith.constant 0 : i32
    %c0_i32_0 = arith.constant 0 : i32
    return %arg0, %c0_i32 : i32, i32
  }
}

</mosaic_0001>

<llo_original>
// kernel: tpu_custom_call.1
$region0: #{tpu_custom_call.1}
  #allocation0 [shape = 'u32[]', space=smem, size = 0x4, offset = 0x4, fixed_abs, tag = 'smem constant byte address 0x4 - core index']
  #allocation1 [shape = 'u32[144,128]{1,0:T(1,128)}', space=vmem, size = 0x12000, scoped, tag = 'internal scratch']
  %s0 = inlined_call_operand.hbm [shape: f32[8,1,32], index: 0, kind: input, shape index: {}]
  %s1 = inlined_call_operand.hbm [shape: f32[1,8,32], index: 1, kind: input, shape index: {}]
  %s2 = inlined_call_operand.vmem [shape: f32[1,32], index: 2, kind: input, shape index: {}]
  %s3 = inlined_call_operand.vmem [shape: f32[1,32], index: 3, kind: input, shape index: {}]
  %s4 = inlined_call_operand.hbm [shape: bf16[32,64], index: 4, kind: input, shape index: {}]
  %s5 = inlined_call_operand.vmem [shape: f32[1,64], index: 5, kind: input, shape index: {}]
  %s6 = inlined_call_operand.hbm [shape: f32[64,64], index: 6, kind: output, shape index: {}]
  %s7 = sld [smem:[#allocation0]]
  $region69: #{tpu_custom_call.1} parent=0
    _
  %s9 = ssub.s32 1, %s7
  %s10 = scalar_select 0, %s9, %s7
  $region1: #{tpu_custom_call.1} parent=0
    #allocation2 [shape = 'u8[4096]{0}', space=vmem, size = 0x1000, scoped, tag = 'input window, operand 0']
    #allocation3 [shape = 's32[2]{0}', space=sflag, size = 0x8, scoped, tag = 'scoped memory for tpu_custom_call.1']
    #allocation4 [shape = 's32[2]{0}', space=sflag, size = 0x8, scoped, tag = 'scoped memory for tpu_custom_call.1']
    #allocation5 [shape = 'u8[4096]{0}', space=vmem, size = 0x1000, scoped, tag = 'input window, operand 1, single buffered']
    #allocation6 [shape = 's32[1]{0}', space=sflag, size = 0x4, scoped, tag = 'scoped memory for tpu_custom_call.1']
    #allocation7 [shape = 'u8[8192]{0}', space=vmem, size = 0x2000, scoped, tag = 'input window, operand 4, single buffered']
    #allocation8 [shape = 'u8[32768]{0}', space=vmem, size = 0x8000, scoped, tag = 'output window, operand 0']
    %11 = vsyncpa [#allocation3], 0
    %s12 = scalar_lea.sflag [#allocation3], 1
    %13 = vsyncpa %s12, 0
    %14 = vsyncpa [#allocation6], 0
    %15 = vsyncpa [#allocation4], 0
    %s16 = scalar_lea.sflag [#allocation4], 1
    %17 = vsyncpa %s16, 0
    loop: start=0, step=1, limit=4
    $region2: #{tpu_custom_call.1} parent=1 // loop_pre_header
      _
    $region3: #{tpu_custom_call.1} parent=1 // loop_header
      %s19 = sphi 0, %s23
      %p20 = scmp.ge.s32.totalorder %s19, 4
      %s29 = sphi 0, %s31
      %s32 = sphi 0, %s29
      %s33 = sphi 0, %s32
      %s49 = sphi 0, %s33
      %s53 = sphi 0, %s53
      %s55 = sphi 0, %s53
      %s56 = sphi 0, %s55
      %s70 = sphi 0, %s56
      %s74 = sphi 0, %s74
      %s76 = sphi 0, %s74
      %s77 = sphi 0, %s76
      %s91 = sphi 0, %s77
      %s95 = sphi 0, %s95
      %s97 = sphi 0, %s95
      %s98 = sphi 0, %s97
      %s112 = sphi 0, %s98
      %s116 = sphi 0, %s116
      %s118 = sphi 0, %s116
      %s119 = sphi 0, %s118
      %s133 = sphi 0, %s119
      %s137 = sphi 0, %s137
      %s139 = sphi 0, %s137
      %s140 = sphi 0, %s139
      %s154 = sphi 0, %s140
      %s160 = sphi 0, %s162
      %s163 = sphi 0, %s160
      %s164 = sphi 0, %s163
      %s180 = sphi 0, %s164
    $region4: #{tpu_custom_call.1} parent=1 // loop_header_branch
      %22 = sbr.rel (%p20) target = $region8
    $region5: #{tpu_custom_call.1} parent=1 // loop_body
      %s24 = ssub.s32 %s19, 1
      %s25 = ssub.s32 %s19, 2
      %s26 = sadd.s32 %s19, 1
      %s27 = ssub.s32 %s19, %s26
      %p28 = scmp.eq.s32.totalorder %s27, 0
      %s30 = sadd.s32 %s29, 1
      %s31 = scalar_select %p28, %s29, %s30
      %p34 = pneg %p28
      %p35 = scmp.eq.s32.totalorder %s19, 1
      %p36 = por %p34, %p35
      %p37 = scmp.ne.s32.totalorder %s29, %s32
      %p38 = scmp.eq.s32.totalorder %s19, 0
      %p39 = por %p37, %p38
      %p40 = scmp.ne.s32.totalorder %s29, %s32
      %p41 = scmp.eq.s32.totalorder %s24, 1
      %p42 = por %p40, %p41
      %p43 = scmp.ne.s32.totalorder %s32, %s33
      %p44 = scmp.eq.s32.totalorder %s24, 0
      %p45 = por %p43, %p44
      %p46 = scmp.ne.s32.totalorder %s32, %s33
      %p47 = scmp.eq.s32.totalorder %s25, 1
      %p48 = por %p46, %p47
      %p50 = scmp.ne.s32.totalorder %s33, %s49
      %p51 = scmp.eq.s32.totalorder %s25, 0
      %p52 = por %p50, %p51
      %s54 = sadd.s32 %s53, 1
      %p57 = scmp.eq.s32.totalorder %s19, 1
      %p58 = scmp.ne.s32.totalorder %s53, %s55
      %p59 = scmp.eq.s32.totalorder %s19, 0
      %p60 = por %p58, %p59
      %p61 = scmp.ne.s32.totalorder %s53, %s55
      %p62 = scmp.eq.s32.totalorder %s24, 1
      %p63 = por %p61, %p62
      %p64 = scmp.ne.s32.totalorder %s55, %s56
      %p65 = scmp.eq.s32.totalorder %s24, 0
      %p66 = por %p64, %p65
      %p67 = scmp.ne.s32.totalorder %s55, %s56
      %p68 = scmp.eq.s32.totalorder %s25, 1
      %p69 = por %p67, %p68
      %p71 = scmp.ne.s32.totalorder %s56, %s70
      %p72 = scmp.eq.s32.totalorder %s25, 0
      %p73 = por %p71, %p72
      %s75 = sadd.s32 %s74, 1
      %p78 = scmp.eq.s32.totalorder %s19, 1
      %p79 = scmp.ne.s32.totalorder %s74, %s76
      %p80 = scmp.eq.s32.totalorder %s19, 0
      %p81 = por %p79, %p80
      %p82 = scmp.ne.s32.totalorder %s74, %s76
      %p83 = scmp.eq.s32.totalorder %s24, 1
      %p84 = por %p82, %p83
      %p85 = scmp.ne.s32.totalorder %s76, %s77
      %p86 = scmp.eq.s32.totalorder %s24, 0
      %p87 = por %p85, %p86
      %p88 = scmp.ne.s32.totalorder %s76, %s77
      %p89 = scmp.eq.s32.totalorder %s25, 1
      %p90 = por %p88, %p89
      %p92 = scmp.ne.s32.totalorder %s77, %s91
      %p93 = scmp.eq.s32.totalorder %s25, 0
      %p94 = por %p92, %p93
      %s96 = sadd.s32 %s95, 1
      %p99 = scmp.eq.s32.totalorder %s19, 1
      %p100 = scmp.ne.s32.totalorder %s95, %s97
      %p101 = scmp.eq.s32.totalorder %s19, 0
      %p102 = por %p100, %p101
      %p103 = scmp.ne.s32.totalorder %s95, %s97
      %p104 = scmp.eq.s32.totalorder %s24, 1
      %p105 = por %p103, %p104
      %p106 = scmp.ne.s32.totalorder %s97, %s98
      %p107 = scmp.eq.s32.totalorder %s24, 0
      %p108 = por %p106, %p107
      %p109 = scmp.ne.s32.totalorder %s97, %s98
      %p110 = scmp.eq.s32.totalorder %s25, 1
      %p111 = por %p109, %p110
      %p113 = scmp.ne.s32.totalorder %s98, %s112
      %p114 = scmp.eq.s32.totalorder %s25, 0
      %p115 = por %p113, %p114
      %s117 = sadd.s32 %s116, 1
      %p120 = scmp.eq.s32.totalorder %s19, 1
      %p121 = scmp.ne.s32.totalorder %s116, %s118
      %p122 = scmp.eq.s32.totalorder %s19, 0
      %p123 = por %p121, %p122
      %p124 = scmp.ne.s32.totalorder %s116, %s118
      %p125 = scmp.eq.s32.totalorder %s24, 1
      %p126 = por %p124, %p125
      %p127 = scmp.ne.s32.totalorder %s118, %s119
      %p128 = scmp.eq.s32.totalorder %s24, 0
      %p129 = por %p127, %p128
      %p130 = scmp.ne.s32.totalorder %s118, %s119
      %p131 = scmp.eq.s32.totalorder %s25, 1
      %p132 = por %p130, %p131
      %p134 = scmp.ne.s32.totalorder %s119, %s133
      %p135 = scmp.eq.s32.totalorder %s25, 0
      %p136 = por %p134, %p135
      %s138 = sadd.s32 %s137, 1
      %p141 = scmp.eq.s32.totalorder %s19, 1
      %p142 = scmp.ne.s32.totalorder %s137, %s139
      %p143 = scmp.eq.s32.totalorder %s19, 0
      %p144 = por %p142, %p143
      %p145 = scmp.ne.s32.totalorder %s137, %s139
      %p146 = scmp.eq.s32.totalorder %s24, 1
      %p147 = por %p145, %p146
      %p148 = scmp.ne.s32.totalorder %s139, %s140
      %p149 = scmp.eq.s32.totalorder %s24, 0
      %p150 = por %p148, %p149
      %p151 = scmp.ne.s32.totalorder %s139, %s140
      %p152 = scmp.eq.s32.totalorder %s25, 1
      %p153 = por %p151, %p152
      %p155 = scmp.ne.s32.totalorder %s140, %s154
      %p156 = scmp.eq.s32.totalorder %s25, 0
      %p157 = por %p155, %p156
      %s158 = ssub.s32 %s19, %s26
      %p159 = scmp.eq.s32.totalorder %s158, 0
      %s161 = sadd.s32 %s160, 1
      %s162 = scalar_select %p159, %s160, %s161
      %p165 = pneg %p159
      %p166 = scmp.eq.s32.totalorder %s19, 1
      %p167 = por %p165, %p166
      %p168 = scmp.ne.s32.totalorder %s160, %s163
      %p169 = scmp.eq.s32.totalorder %s19, 0
      %p170 = por %p168, %p169
      %p171 = scmp.ne.s32.totalorder %s160, %s163
      %p172 = scmp.eq.s32.totalorder %s24, 1
      %p173 = por %p171, %p172
      %p174 = scmp.ne.s32.totalorder %s163, %s164
      %p175 = scmp.eq.s32.totalorder %s24, 0
      %p176 = por %p174, %p175
      %p177 = scmp.ne.s32.totalorder %s163, %s164
      %p178 = scmp.eq.s32.totalorder %s25, 1
      %p179 = por %p177, %p178
      %p181 = scmp.ne.s32.totalorder %s164, %s180
      %p182 = scmp.eq.s32.totalorder %s25, 0
      %p183 = por %p181, %p182
      %p184 = scmp.le.s32.totalorder 1, %s19
      %p185 = scmp.lt.s32.totalorder %s19, 3
      %p186 = pnand %p184, %p185
      %p187 = pneg %p186
      // Predicated region
      $region9: #{tpu_custom_call.1} parent=5 // pred_check
        _
      $region10: #{tpu_custom_call.1} parent=5 // pred_check_branch
        %189 = sbr.rel (%p186) target = $region12
      $region11: #{tpu_custom_call.1} parent=5 // pred_region
        %s190 = ssub.s32 %s19, 1
        // Predicated region
        $region13: #{tpu_custom_call.1} parent=11 // pred_check
          %p191 = pneg %p66
        $region14: #{tpu_custom_call.1} parent=11 // pred_check_branch
          %193 = sbr.rel (%p191) target = $region16
        $region15: #{tpu_custom_call.1} parent=11 // pred_region
          %s195 = ssub.s32 128, 128
          %196 = vsyncadd [#allocation6], %s195
          %s198 = sshll.u32 [#allocation5], 4
          %s199 = int_to_ptr.vmem [resolvable:$true] %s198
          %201 = dma.hbm_to_vmem [thread:$0]  %s1, 128, %s199, [#allocation6]
        $region16: #{tpu_custom_call.1} parent=11 // pred_fallthru
          _
        // Predicated region
        $region17: #{tpu_custom_call.1} parent=11 // pred_check
          %p202 = pneg %p87
        $region18: #{tpu_custom_call.1} parent=11 // pred_check_branch
          %204 = sbr.rel (%p202) target = $region20
        $region19: #{tpu_custom_call.1} parent=11 // pred_region
          _
        $region20: #{tpu_custom_call.1} parent=11 // pred_fallthru
          _
        // Predicated region
        $region21: #{tpu_custom_call.1} parent=11 // pred_check
          %p205 = pneg %p108
        $region22: #{tpu_custom_call.1} parent=11 // pred_check_branch
          %207 = sbr.rel (%p205) target = $region24
        $region23: #{tpu_custom_call.1} parent=11 // pred_region
          _
        $region24: #{tpu_custom_call.1} parent=11 // pred_fallthru
          _
        // Predicated region
        $region25: #{tpu_custom_call.1} parent=11 // pred_check
          %p208 = pneg %p129
        $region26: #{tpu_custom_call.1} parent=11 // pred_check_branch
          %210 = sbr.rel (%p208) target = $region28
        $region27: #{tpu_custom_call.1} parent=11 // pred_region
          %s212 = ssub.s32 256, 256
          %213 = vsyncadd [#allocation6], %s212
          %s214 = sshll.u32 [#allocation7], 4
          %s215 = int_to_ptr.vmem [resolvable:$true] %s214
          %220 = dma.hbm_to_vmem [thread:$0]  %s4, 256, %s215, [#allocation6], 64, 64, 4
        $region28: #{tpu_custom_call.1} parent=11 // pred_fallthru
          _
        // Predicated region
        $region29: #{tpu_custom_call.1} parent=11 // pred_check
          %p221 = pneg %p150
        $region30: #{tpu_custom_call.1} parent=11 // pred_check_branch
          %223 = sbr.rel (%p221) target = $region32
        $region31: #{tpu_custom_call.1} parent=11 // pred_region
          _
        $region32: #{tpu_custom_call.1} parent=11 // pred_fallthru
          _
      $region12: #{tpu_custom_call.1} parent=5 // pred_fallthru
        _
      %p224 = scmp.lt.s32.totalorder %s19, 2
      // Predicated region
      $region33: #{tpu_custom_call.1} parent=5 // pred_check
        %p225 = pneg %p224
      $region34: #{tpu_custom_call.1} parent=5 // pred_check_branch
        %227 = sbr.rel (%p225) target = $region36
      $region35: #{tpu_custom_call.1} parent=5 // pred_region
        // Predicated region
        $region37: #{tpu_custom_call.1} parent=35 // pred_check
          %p228 = pneg %p39
        $region38: #{tpu_custom_call.1} parent=35 // pred_check_branch
          %230 = sbr.rel (%p228) target = $region40
        $region39: #{tpu_custom_call.1} parent=35 // pred_region
          %s231 = sand.u32 %s29, 1
          %s232 = scalar_lea.sflag [#allocation3], %s231
          %s233 = sand.u32 %s29, 1
          %s234 = smul.addr %s233, 4
          %s235 = scalar_lea.vmem [#allocation2], %s234
          %s236 = smul.u32 4, %s19
          %s238 = ssub.s32 64, 64
          %239 = vsyncadd %s232, %s238
          %s240 = smul.addr %s236, 16
          %s241 = scalar_lea.hbm %s0, %s240
          %s242 = sshll.u32 %s235, 4
          %s243 = int_to_ptr.vmem [resolvable:$true] %s242
          %248 = dma.hbm_to_vmem [thread:$0]  %s241, 64, %s243, %s232, 16, 16, 1
        $region40: #{tpu_custom_call.1} parent=35 // pred_fallthru
          _
      $region36: #{tpu_custom_call.1} parent=5 // pred_fallthru
        _
      %p249 = scmp.le.s32.totalorder 1, %s19
      %p250 = scmp.lt.s32.totalorder %s19, 3
      %p251 = pnand %p249, %p250
      %p252 = pneg %p251
      // Predicated region
      $region41: #{tpu_custom_call.1} parent=5 // pred_check
        _
      $region42: #{tpu_custom_call.1} parent=5 // pred_check_branch
        %254 = sbr.rel (%p251) target = $region44
      $region43: #{tpu_custom_call.1} parent=5 // pred_region
        %s255 = ssub.s32 %s19, 1
        %s256 = sand.u32 %s32, 1
        %s257 = scalar_lea.sflag [#allocation3], %s256
        %s258 = sand.u32 %s32, 1
        %s259 = smul.addr %s258, 4
        %s260 = scalar_lea.vmem [#allocation2], %s259
        // Predicated region
        $region45: #{tpu_custom_call.1} parent=43 // pred_check
          %p261 = pneg %p45
        $region46: #{tpu_custom_call.1} parent=43 // pred_check_branch
          %263 = sbr.rel (%p261) target = $region48
        $region47: #{tpu_custom_call.1} parent=43 // pred_region
          %264 = dma.done %s257, 64
        $region48: #{tpu_custom_call.1} parent=43 // pred_fallthru
          _
        // Predicated region
        $region49: #{tpu_custom_call.1} parent=43 // pred_check
          %p265 = pneg %p66
        $region50: #{tpu_custom_call.1} parent=43 // pred_check_branch
          %267 = sbr.rel (%p265) target = $region52
        $region51: #{tpu_custom_call.1} parent=43 // pred_region
          %268 = dma.done [#allocation6], 128
        $region52: #{tpu_custom_call.1} parent=43 // pred_fallthru
          _
        // Predicated region
        $region53: #{tpu_custom_call.1} parent=43 // pred_check
          %p269 = pneg %p129
        $region54: #{tpu_custom_call.1} parent=43 // pred_check_branch
          %271 = sbr.rel (%p269) target = $region56
        $region55: #{tpu_custom_call.1} parent=43 // pred_region
          %272 = dma.done [#allocation6], 256
        $region56: #{tpu_custom_call.1} parent=43 // pred_fallthru
          _
        %s273 = sand.u32 %s32, 1
        %s274 = scalar_lea.sflag [#allocation3], %s273
        %s275 = sand.u32 %s32, 1
        %s276 = smul.addr %s275, 4
        %s277 = scalar_lea.vmem [#allocation2], %s276
        %p278 = pneg %p45
        %p279 = pneg %p42
        %p280 = pneg %p66
        %p281 = pneg %p63
        %p282 = pneg %p87
        %p283 = pneg %p84
        %p284 = pneg %p108
        %p285 = pneg %p105
        %p286 = pneg %p129
        %p287 = pneg %p126
        %p288 = pneg %p150
        %p289 = pneg %p147
        %p290 = pneg %p176
        %p291 = pneg %p173
        %s292 = sand.u32 %s163, 1
        %s293 = scalar_lea.sflag [#allocation4], %s292
        %s294 = sand.u32 %s163, 1
        %s295 = smul.addr %s294, 32
        %s296 = scalar_lea.vmem [#allocation8], %s295
        %s297 = smul.u32 4, %s24
        %s298 = smul.u32 4, %s24
        %v300 = vld [vmem:[%s260] sm:$0x1]
        %v301 = vld [vmem:[%s260 + $0x1] sm:$0x1]
        %v302 = vld [vmem:[%s260 + $0x2] sm:$0x1]
        %v303 = vld [vmem:[%s260 + $0x3] sm:$0x1]
        %v304 = vld [vmem:[#allocation5] sm:$0xff]
        %v309 = vlaneseq
        %v310 = vshrl.u32 %v309, 7
        %v311 = vsub.s32 0, %v310
        %v312 = vrot.slane %v300, %v311
        %v313 = vlaneseq
        %v314 = vshrl.u32 %v313, 7
        %v315 = vsub.s32 0, %v314
        %v316 = vrot.slane %v301, %v315
        %v317 = vlaneseq
        %v318 = vshrl.u32 %v317, 7
        %v319 = vsub.s32 0, %v318
        %v320 = vrot.slane %v302, %v319
        %v321 = vlaneseq
        %v322 = vshrl.u32 %v321, 7
        %v323 = vsub.s32 0, %v322
        %v324 = vrot.slane %v303, %v323
        %v329 = vadd.f32 %v312, %v304
        %v330 = vadd.f32 %v316, %v304
        %v331 = vadd.f32 %v320, %v304
        %v332 = vadd.f32 %v324, %v304
        %vm333 = vcmask 261120
        %v334 = vsel %vm333, %v329, 0.0
        %335 = vadd.xlane.f32.xlu0 %v334
        %v336 = vpop.xlane.xlu0 %335
        %v337 = vsel %vm333, %v330, 0.0
        %338 = vadd.xlane.f32.xlu0 %v337
        %v339 = vpop.xlane.xlu0 %338
        %v340 = vsel %vm333, %v331, 0.0
        %341 = vadd.xlane.f32.xlu0 %v340
        %v342 = vpop.xlane.xlu0 %341
        %v343 = vsel %vm333, %v332, 0.0
        %344 = vadd.xlane.f32.xlu0 %v343
        %v345 = vpop.xlane.xlu0 %344
        %v346 = vrcp.pop 32.0
        %v347 = vmul.f32 %v336, %v346
        %v348 = vmul.f32 %v339, %v346
        %v349 = vmul.f32 %v342, %v346
        %v350 = vmul.f32 %v345, %v346
        %v351 = vsub.f32 %v329, %v347
        %v352 = vsub.f32 %v330, %v348
        %v353 = vsub.f32 %v331, %v349
        %v354 = vsub.f32 %v332, %v350
        %v355 = vmul.f32 %v351, %v351
        %v356 = vmul.f32 %v352, %v352
        %v357 = vmul.f32 %v353, %v353
        %v358 = vmul.f32 %v354, %v354
        %v359 = vsel %vm333, %v355, 0.0
        %360 = vadd.xlane.f32.xlu0 %v359
        %v361 = vpop.xlane.xlu0 %360
        %v362 = vsel %vm333, %v356, 0.0
        %363 = vadd.xlane.f32.xlu0 %v362
        %v364 = vpop.xlane.xlu0 %363
        %v365 = vsel %vm333, %v357, 0.0
        %366 = vadd.xlane.f32.xlu0 %v365
        %v367 = vpop.xlane.xlu0 %366
        %v368 = vsel %vm333, %v358, 0.0
        %369 = vadd.xlane.f32.xlu0 %v368
        %v370 = vpop.xlane.xlu0 %369
        %v371 = vmul.f32 %v361, %v346
        %v372 = vmul.f32 %v364, %v346
        %v373 = vmul.f32 %v367, %v346
        %v374 = vmul.f32 %v370, %v346
        %v375 = vadd.f32 %v371, 1e-05
        %v376 = vadd.f32 %v372, 1e-05
        %v377 = vadd.f32 %v373, 1e-05
        %v378 = vadd.f32 %v374, 1e-05
        %v379 = vrsqrt.pop %v375
        %v380 = vrsqrt.pop %v376
        %v381 = vrsqrt.pop %v377
        %v382 = vrsqrt.pop %v378
        %v383 = vmul.f32 %v351, %v379
        %v384 = vmul.f32 %v352, %v380
        %v385 = vmul.f32 %v353, %v381
        %v386 = vmul.f32 %v354, %v382
        %v387 = vld [vmem:[%s2] sm:$0x1]
        %v389 = vlaneseq
        %v390 = vshrl.u32 %v389, 7
        %v391 = vsub.s32 0, %v390
        %v392 = vrot.slane %v387, %v391
        %v394 = vmul.f32 %v383, %v392
        %v395 = vmul.f32 %v384, %v392
        %v396 = vmul.f32 %v385, %v392
        %v397 = vmul.f32 %v386, %v392
        %v398 = vld [vmem:[%s3] sm:$0x1]
        %v400 = vlaneseq
        %v401 = vshrl.u32 %v400, 7
        %v402 = vsub.s32 0, %v401
        %v403 = vrot.slane %v398, %v402
        %v405 = vadd.f32 %v394, %v403
        %v406 = vadd.f32 %v395, %v403
        %v407 = vadd.f32 %v396, %v403
        %v408 = vadd.f32 %v397, %v403
        %v409 = vpack.c.bf16 %v406, %v405
        %v410 = vpack.c.bf16 %v408, %v407
        %v411 = vld [vmem:[#allocation7] sm:$0xf]
        %v412 = vld [vmem:[#allocation7 + $0x4] sm:$0xf]
        %v413 = vld [vmem:[#allocation7 + $0x8] sm:$0xf]
        %v414 = vld [vmem:[#allocation7 + $0xc] sm:$0xf]
        %v415 = vld [vmem:[%s5] sm:$0x1]
        %v417 = vlaneseq
        %v418 = vshrl.u32 %v417, 7
        %v419 = vsub.s32 0, %v418
        %v420 = vrot.slane %v415, %v419
        %v426 = vunpack.c.l.b16 %v411
        %v427 = vunpack.c.l.b16 %v412
        %v428 = vunpack.c.l.b16 %v413
        %v429 = vunpack.c.l.b16 %v414
        %v430 = vpack.c.b16 %v427, %v426
        %v431 = vpack.c.b16 %v429, %v428
        %v435 = vsel %vm333, %v409, 0
        %v438 = vsel %vm333, %v410, 0
        %440 = vmatprep.subr.bf16.mxu0 0
        %441 = vmatpush1.bf16.msra.mxu0 %v430
        %442 = vmatprep.subr.bf16.mxu0 0
        %443 = vmatpush1.bf16.msra.mxu0 %v431
        %444 = vmatprep.subr.bf16.mxu0 0
        %445 = vmatpush1.bf16.msra.mxu0 0
        %446 = vmatprep.subr.bf16.mxu0 0
        %447 = vmatpush1.bf16.msra.mxu0 0
        %448 = vmatprep.subr.bf16.mxu0 0
        %449 = vmatpush1.bf16.msra.mxu0 0
        %450 = vmatprep.subr.bf16.mxu0 0
        %451 = vmatpush1.bf16.msra.mxu0 0
        %452 = vmatprep.subr.bf16.mxu0 0
        %453 = vmatpush1.bf16.msra.mxu0 0
        %454 = vmatprep.subr.bf16.mxu0 0
        %455 = vmatpush1.bf16.msra.mxu0 0
        %456 = vmatprep.subr.bf16.mxu0 0
        %457 = vmatpush1.bf16.msra.mxu0 0
        %458 = vmatprep.subr.bf16.mxu0 0
        %459 = vmatpush1.bf16.msra.mxu0 0
        %460 = vmatprep.subr.bf16.mxu0 0
        %461 = vmatpush1.bf16.msra.mxu0 0
        %462 = vmatprep.subr.bf16.mxu0 0
        %463 = vmatpush1.bf16.msra.mxu0 0
        %464 = vmatprep.subr.bf16.mxu0 0
        %465 = vmatpush1.bf16.msra.mxu0 0
        %466 = vmatprep.subr.bf16.mxu0 0
        %467 = vmatpush1.bf16.msra.mxu0 0
        %468 = vmatprep.subr.bf16.mxu0 0
        %469 = vmatpush1.bf16.msra.mxu0 0
        %470 = vmatprep.subr.bf16.mxu0 0
        %471 = vmatpush1.bf16.msra.mxu0 0
        %472 = vmatprep.mubr.bf16.mxu0 0
        %473 = vmatmul.mubr.bf16.gmra.mrb[0].mxu0 %v435
        %v474 = vpop.f32.mrb[0].mxu0
        %v475 = vadd.f32 %v420, %v474
        %v476 = vpop.f32.mrb[0].mxu0
        %v477 = vpop.f32.mrb[0].mxu0
        %v478 = vadd.f32 %v420, %v477
        %v479 = vpop.f32.mrb[0].mxu0
        %480 = vmatprep.mubr.bf16.mxu0 0
        %481 = vmatmul.mubr.bf16.gmra.mrb[0].mxu0 %v438
        %v482 = vpop.f32.mrb[0].mxu0
        %v483 = vadd.f32 %v420, %v482
        %v484 = vpop.f32.mrb[0].mxu0
        %v485 = vpop.f32.mrb[0].mxu0
        %v486 = vadd.f32 %v420, %v485
        %v487 = vpop.f32.mrb[0].mxu0
        %488 = vdwg.mxu0
        %vm489 = vcmask 523264
        %490 = vst.msk [vmem:[%s296] sm:$0xff] %vm489, %v475
        %491 = vst.msk [vmem:[%s296 + $0x8] sm:$0xff] %vm489, %v478
        %492 = vst.msk [vmem:[%s296 + $0x10] sm:$0xff] %vm489, %v483
        %493 = vst.msk [vmem:[%s296 + $0x18] sm:$0xff] %vm489, %v486
        %s494 = sand.u32 %s163, 1
        %s495 = scalar_lea.sflag [#allocation4], %s494
        %s496 = sand.u32 %s163, 1
        %s497 = smul.addr %s496, 32
        %s498 = scalar_lea.vmem [#allocation8], %s497
        // Predicated region
        $region57: #{tpu_custom_call.1} parent=43 // pred_check
          %p499 = pneg %p173
        $region58: #{tpu_custom_call.1} parent=43 // pred_check_branch
          %501 = sbr.rel (%p499) target = $region60
        $region59: #{tpu_custom_call.1} parent=43 // pred_region
          %s502 = smul.u32 4, %s24
          %s504 = ssub.s32 512, 512
          %505 = vsyncadd %s495, %s504
          %s506 = smul.addr %s502, 128
          %s507 = scalar_lea.hbm %s6, %s506
          %s508 = sshll.u32 %s498, 4
          %s509 = int_to_ptr.vmem [resolvable:$true] %s508
          %514 = dma.vmem_to_hbm [thread:$0]  %s509, 512, %s507, %s495, 128, 128, 8
        $region60: #{tpu_custom_call.1} parent=43 // pred_fallthru
          _
      $region44: #{tpu_custom_call.1} parent=5 // pred_fallthru
        _
      %p515 = scmp.le.s32.totalorder 2, %s19
      // Predicated region
      $region61: #{tpu_custom_call.1} parent=5 // pred_check
        %p516 = pneg %p515
      $region62: #{tpu_custom_call.1} parent=5 // pred_check_branch
        %518 = sbr.rel (%p516) target = $region64
      $region63: #{tpu_custom_call.1} parent=5 // pred_region
        %s519 = ssub.s32 %s19, 2
        // Predicated region
        $region65: #{tpu_custom_call.1} parent=63 // pred_check
          %p520 = pneg %p179
        $region66: #{tpu_custom_call.1} parent=63 // pred_check_branch
          %522 = sbr.rel (%p520) target = $region68
        $region67: #{tpu_custom_call.1} parent=63 // pred_region
          %s523 = sand.u32 %s164, 1
          %s524 = scalar_lea.sflag [#allocation4], %s523
          %s525 = sand.u32 %s164, 1
          %s526 = smul.addr %s525, 32
          %s527 = scalar_lea.vmem [#allocation8], %s526
          %528 = dma.done %s524, 512
        $region68: #{tpu_custom_call.1} parent=63 // pred_fallthru
          _
      $region64: #{tpu_custom_call.1} parent=5 // pred_fallthru
        _
    $region6: #{tpu_custom_call.1} parent=1 // loop_footer
      %s23 = sadd.s32 1, %s19
    $region7: #{tpu_custom_call.1} parent=1 // loop_footer_branch
      %18 = sbr.rel target = $region3
    $region8: #{tpu_custom_call.1} parent=1 // loop_exit
      _
    %529 = vsyncpa [#allocation3], 1
    %s530 = scalar_lea.sflag [#allocation3], 1
    %531 = vsyncpa %s530, 1
    %532 = vsyncpa [#allocation6], 1
    %533 = vsyncpa [#allocation4], 1
    %s534 = scalar_lea.sflag [#allocation4], 1
    %535 = vsyncpa %s534, 1

</llo_original>
